<compile_context>
chip_gen: v5e
topology: v5e:2x2
jax: 0.10.0
libtpu: 0.0.40
codegen_flags: <defaults>
</compile_context>

<pallas_src>
import jax
import jax.numpy as jnp
from jax.experimental import pallas as pl
from jax.experimental.pallas import tpu as pltpu


def dwt_kernel(x_ref, c_ref, o_ref):
    # x_ref: (nb, Hb, Wt) raw pixels (Hb, Wt even)
    # c_ref: (Wt, Wt) fused column-pair combine [0.5*(even+odd) | 0.5*(odd-even)]
    # o_ref: (nb, 4, hb, wt) subbands [LL, HL, LH, HH]
    nb, Hb, Wt = x_ref.shape
    hb = Hb // 2
    wt = Wt // 2

    # Even/odd rows via sublane-strided loads (no extra HBM deinterleave pass).
    xe = x_ref[:, pl.ds(0, hb, stride=2), :]   # rows 0, 2, 4, ...
    xo = x_ref[:, pl.ds(1, hb, stride=2), :]   # rows 1, 3, 5, ...

    # Row butterfly on the VPU; flatten so the MXU sees M = nb*hb (one big
    # pipelined matmul per combine instead of nb tiny ones).
    rs = (xe + xo).reshape(nb * hb, Wt)        # -> LL | HL
    rd = (xo - xe).reshape(nb * hb, Wt)        # -> LH | HH

    # Column-pair combine on the MXU: one fused RHS, two matmuls, f32 acc.
    c = c_ref[...]
    s = jnp.dot(rs, c, preferred_element_type=jnp.float32)    # [LL | HL]
    d = jnp.dot(rd, c, preferred_element_type=jnp.float32)    # [LH | HH]

    # Direct per-subband stores (no stacked f32 output temporary).
    dt = o_ref.dtype
    o_ref[:, 0, :, :] = s[:, :wt].reshape(nb, hb, wt).astype(dt)   # LL
    o_ref[:, 1, :, :] = s[:, wt:].reshape(nb, hb, wt).astype(dt)   # HL
    o_ref[:, 2, :, :] = d[:, :wt].reshape(nb, hb, wt).astype(dt)   # LH
    o_ref[:, 3, :, :] = d[:, wt:].reshape(nb, hb, wt).astype(dt)   # HH


def _largest_divisor_leq(n: int, cap: int) -> int:
    cap = max(1, min(n, cap))
    for d in range(cap, 0, -1):
        if n % d == 0:
            return d
    return 1


def _pick_hb(h: int, cap: int) -> int:
    """Largest hb dividing h with hb % 8 == 0 and hb <= cap; falls back to h."""
    for d in range(min(h, max(1, cap)), 0, -1):
        if h % d == 0 and d % 8 == 0:
            return d
    return h


def dwt(x, *, tile_bytes: int = 4 << 20, vmem_limit_bytes: int = 48 * 1024 * 1024):
    """Pallas DWT: (B, C1, C2, H, W) -> (B, C1, C2, 4, H//2, W//2)."""
    B, C1, C2, H, W = x.shape
    if H % 2 or W % 2:
        raise ValueError("H and W must be even for a level-1 DWT")
    N = B * C1 * C2
    h, w = H // 2, W // 2
    dt = x.dtype
    itemsize = jnp.dtype(dt).itemsize

    # Free, contiguous collapse of the batch dims -- no data movement.
    x3 = x.reshape(N, H, W)

    # Column (lane) tiling.  A column tile must keep both the input block
    # (Wt % 128 == 0) and the output block (wt % 128 == 0) lane-aligned, so
    # only 256-multiples dividing W are usable; otherwise keep the full
    # width (always legal).  Cap at 256 so the f32 MXU combine (2*Wt flops
    # per input element) stays below the HBM roofline on v5e.
    Wt = 256 if (W > 256 and W % 256 == 0) else W
    wt = Wt // 2
    gW = W // Wt

    # VMEM budget: fused combine matrix (~double-buffered) + 2x in + 2x out
    # buffers + in-kernel temps (~2 tiles).  Automatically shrinks the tile
    # when a large untiled W forces a big combine matrix.
    const_bytes = Wt * Wt * itemsize
    usable = max(256 * 1024, (vmem_limit_bytes - 2 * const_bytes) // 8)
    budget = min(tile_bytes, usable)

    img_bytes = H * Wt * itemsize          # one image x one column tile
    if img_bytes <= budget:
        # Whole images per step; pack several up to the tile budget, but keep
        # >= 8 (or >= 2) parallel grid steps so both v7x TensorCores get work.
        Hb = H
        nb_cap = max(1, budget // img_bytes)
        if N >= 16:
            nb_cap = min(nb_cap, N // 8)
        elif N >= 2:
            nb_cap = min(nb_cap, N // 2)
        nb = _largest_divisor_leq(N, nb_cap)
    else:
        # One image per step, tile rows.  hb % 8 == 0 (or hb == h) keeps the
        # (8,128) sublane constraint on the output block.
        nb = 1
        hb_cap = max(8, (budget // (itemsize * Wt)) // 2)
        Hb = 2 * _pick_hb(h, hb_cap)
    hb = Hb // 2
    gN = N // nb
    gH = h // hb

    # Never leave the whole transform as a single grid step (one v7x TC idle).
    if gN * gH * gW == 1 and h % 16 == 0:
        hb = h // 2
        Hb = 2 * hb
        gH = 2

    # Fused column-pair combine matrix with the DWT 1/2 scale folded in
    # (0.5 and +/-1 are exact in f32/bf16).  Columns [0, wt): 0.5*(even+odd)
    # -> LL/LH;  columns [wt, 2wt): 0.5*(odd-even) -> HL/HH.
    r = jnp.arange(Wt)[:, None]
    q = jnp.arange(wt)[None, :]
    up = (r == 2 * q).astype(jnp.float32)        # even column of each pair
    dn = (r == 2 * q + 1).astype(jnp.float32)    # odd column of each pair
    comb = jnp.concatenate([0.5 * (up + dn), 0.5 * (dn - up)], axis=1).astype(dt)

    out = pl.pallas_call(
        dwt_kernel,
        out_shape=jax.ShapeDtypeStruct((N, 4, h, w), dt),
        grid=(gN, gH, gW),
        in_specs=[
            pl.BlockSpec((nb, Hb, Wt), lambda i, j, k: (i, j, k)),
            pl.BlockSpec((Wt, Wt), lambda i, j, k: (0, 0)),
        ],
        out_specs=pl.BlockSpec((nb, 4, hb, wt), lambda i, j, k: (i, 0, j, k)),
        compiler_params=pltpu.CompilerParams(
            dimension_semantics=("parallel", "parallel", "parallel"),
            vmem_limit_bytes=vmem_limit_bytes,
        ),
    )(x3, comb)

    # Free, contiguous reshape back to the module's output layout.
    return out.reshape(B, C1, C2, 4, h, w)


def dwt_ref(x):
    """Pure-JAX reference mirroring the PyTorch dwt_init."""
    x01 = x[:, :, :, 0::2, :] / 2
    x02 = x[:, :, :, 1::2, :] / 2
    x1 = x01[:, :, :, :, 0::2]
    x2 = x02[:, :, :, :, 0::2]
    x3 = x01[:, :, :, :, 1::2]
    x4 = x02[:, :, :, :, 1::2]
    x_LL = x1 + x2 + x3 + x4
    x_HL = -x1 - x2 + x3 + x4
    x_LH = -x1 + x2 - x3 + x4
    x_HH = x1 - x2 - x3 + x4
    stacked = jnp.stack((x_LL, x_HL, x_LH, x_HH), axis=5)
    return jnp.transpose(stacked, (0, 1, 2, 5, 3, 4))


if __name__ == "__main__":
    key = jax.random.PRNGKey(0)
    # 5-D input as implied by the module's forward (dims 3/4 are spatial H/W).
    x = jax.random.normal(key, (2, 4, 3, 16, 16), dtype=jnp.float32)

    out = jax.block_until_ready(jax.jit(dwt)(x))

    ref = dwt_ref(x)
    assert out.shape == ref.shape == (2, 4, 3, 4, 8, 8)
    assert jnp.allclose(out, ref, atol=1e-5, rtol=1e-5)

    print("KERNEL_OK")
</pallas_src>

<mosaic_0001>
module attributes {stable_mosaic.version = 11 : i64} {
  func.func @dwt_kernel(%arg0: i32, %arg1: i32, %arg2: i32, %arg3: memref<3x16x16xf32, #tpu.memory_space<vmem>>, %arg4: memref<16x16xf32, #tpu.memory_space<vmem>>, %arg5: memref<3x4x8x8xf32, #tpu.memory_space<vmem>>) attributes {dimension_semantics = [#tpu.dimension_semantics<parallel>, #tpu.dimension_semantics<parallel>, #tpu.dimension_semantics<parallel>], iteration_bounds = array<i64: 8, 1, 1>, scalar_prefetch = 0 : i64, scratch_operands = 0 : i64, tpu.core_type = #tpu.core_type<tc>, window_params = [{transform_indices = @transform_0, window_bounds = array<i64: 3, 16, 16>}, {pipeline_mode = #tpu.pipeline_mode<synchronous>, transform_indices = @transform_1, window_bounds = array<i64: 16, 16>}, {transform_indices = @transform_2, window_bounds = array<i64: 3, 4, 8, 8>}]} {
    %c0 = arith.constant 0 : index
    %c0_0 = arith.constant 0 : index
    %c0_1 = arith.constant 0 : index
    %0 = tpu.strided_load %arg3[%c0, %c0_0, %c0_1] {strides = array<i32: 1, 2, 1>} : memref<3x16x16xf32, #tpu.memory_space<vmem>>, vector<3x8x16xf32>
    %c0_2 = arith.constant 0 : index
    %c1 = arith.constant 1 : index
    %c0_3 = arith.constant 0 : index
    %1 = tpu.strided_load %arg3[%c0_2, %c1, %c0_3] {strides = array<i32: 1, 2, 1>} : memref<3x16x16xf32, #tpu.memory_space<vmem>>, vector<3x8x16xf32>
    %2 = arith.addf %0, %1 : vector<3x8x16xf32>
    %3 = vector.shape_cast %2 : vector<3x8x16xf32> to vector<24x16xf32>
    %4 = arith.subf %1, %0 : vector<3x8x16xf32>
    %5 = vector.shape_cast %4 : vector<3x8x16xf32> to vector<24x16xf32>
    %c0_4 = arith.constant 0 : index
    %c0_5 = arith.constant 0 : index
    %6 = vector.load %arg4[%c0_4, %c0_5] : memref<16x16xf32, #tpu.memory_space<vmem>>, vector<16x16xf32>
    %cst = arith.constant dense<0.000000e+00> : vector<24x16xf32>
    %7 = tpu.matmul %3, %6, %cst {dimension_numbers = #tpu.dot_dimension_numbers<[1], [0], [0], [1], [0, 0, 1, 1], [], []>} : vector<24x16xf32>, vector<16x16xf32>, vector<24x16xf32> -> vector<24x16xf32>
    %cst_6 = arith.constant dense<0.000000e+00> : vector<24x16xf32>
    %8 = tpu.matmul %5, %6, %cst_6 {dimension_numbers = #tpu.dot_dimension_numbers<[1], [0], [0], [1], [0, 0, 1, 1], [], []>} : vector<24x16xf32>, vector<16x16xf32>, vector<24x16xf32> -> vector<24x16xf32>
    %9 = vector.extract_strided_slice %7 {offsets = [0, 0], sizes = [24, 8], strides = [1, 1]} : vector<24x16xf32> to vector<24x8xf32>
    %10 = vector.shape_cast %9 : vector<24x8xf32> to vector<3x8x8xf32>
    %c0_7 = arith.constant 0 : index
    %c0_8 = arith.constant 0 : index
    %c0_9 = arith.constant 0 : index
    %c0_10 = arith.constant 0 : index
    %11 = vector.load %arg5[%c0_7, %c0_8, %c0_9, %c0_10] : memref<3x4x8x8xf32, #tpu.memory_space<vmem>>, vector<3x1x8x8xf32>
    %12 = vector.shape_cast %11 : vector<3x1x8x8xf32> to vector<3x8x8xf32>
    %13 = vector.shape_cast %10 : vector<3x8x8xf32> to vector<3x1x8x8xf32>
    tpu.vector_store %arg5[%c0_7, %c0_8, %c0_9, %c0_10], %13 {strides = array<i32>} : memref<3x4x8x8xf32, #tpu.memory_space<vmem>>, vector<3x1x8x8xf32>,
    %14 = vector.extract_strided_slice %7 {offsets = [0, 8], sizes = [24, 8], strides = [1, 1]} : vector<24x16xf32> to vector<24x8xf32>
    %15 = vector.shape_cast %14 : vector<24x8xf32> to vector<3x8x8xf32>
    %c0_11 = arith.constant 0 : index
    %c1_12 = arith.constant 1 : index
    %c0_13 = arith.constant 0 : index
    %c0_14 = arith.constant 0 : index
    %16 = vector.load %arg5[%c0_11, %c1_12, %c0_13, %c0_14] : memref<3x4x8x8xf32, #tpu.memory_space<vmem>>, vector<3x1x8x8xf32>
    %17 = vector.shape_cast %16 : vector<3x1x8x8xf32> to vector<3x8x8xf32>
    %18 = vector.shape_cast %15 : vector<3x8x8xf32> to vector<3x1x8x8xf32>
    tpu.vector_store %arg5[%c0_11, %c1_12, %c0_13, %c0_14], %18 {strides = array<i32>} : memref<3x4x8x8xf32, #tpu.memory_space<vmem>>, vector<3x1x8x8xf32>,
    %19 = vector.extract_strided_slice %8 {offsets = [0, 0], sizes = [24, 8], strides = [1, 1]} : vector<24x16xf32> to vector<24x8xf32>
    %20 = vector.shape_cast %19 : vector<24x8xf32> to vector<3x8x8xf32>
    %c0_15 = arith.constant 0 : index
    %c2 = arith.constant 2 : index
    %c0_16 = arith.constant 0 : index
    %c0_17 = arith.constant 0 : index
    %21 = vector.load %arg5[%c0_15, %c2, %c0_16, %c0_17] : memref<3x4x8x8xf32, #tpu.memory_space<vmem>>, vector<3x1x8x8xf32>
    %22 = vector.shape_cast %21 : vector<3x1x8x8xf32> to vector<3x8x8xf32>
    %23 = vector.shape_cast %20 : vector<3x8x8xf32> to vector<3x1x8x8xf32>
    tpu.vector_store %arg5[%c0_15, %c2, %c0_16, %c0_17], %23 {strides = array<i32>} : memref<3x4x8x8xf32, #tpu.memory_space<vmem>>, vector<3x1x8x8xf32>,
    %24 = vector.extract_strided_slice %8 {offsets = [0, 8], sizes = [24, 8], strides = [1, 1]} : vector<24x16xf32> to vector<24x8xf32>
    %25 = vector.shape_cast %24 : vector<24x8xf32> to vector<3x8x8xf32>
    %c0_18 = arith.constant 0 : index
    %c3 = arith.constant 3 : index
    %c0_19 = arith.constant 0 : index
    %c0_20 = arith.constant 0 : index
    %26 = vector.load %arg5[%c0_18, %c3, %c0_19, %c0_20] : memref<3x4x8x8xf32, #tpu.memory_space<vmem>>, vector<3x1x8x8xf32>
    %27 = vector.shape_cast %26 : vector<3x1x8x8xf32> to vector<3x8x8xf32>
    %28 = vector.shape_cast %25 : vector<3x8x8xf32> to vector<3x1x8x8xf32>
    tpu.vector_store %arg5[%c0_18, %c3, %c0_19, %c0_20], %28 {strides = array<i32>} : memref<3x4x8x8xf32, #tpu.memory_space<vmem>>, vector<3x1x8x8xf32>,
    return
  }
  func.func @transform_0(%arg0: i32, %arg1: i32, %arg2: i32) -> (i32, i32, i32) {
    %c0_i32 = arith.constant 0 : i32
    return %arg0, %arg1, %arg2 : i32, i32, i32
  }
  func.func @transform_1(%arg0: i32, %arg1: i32, %arg2: i32) -> (i32, i32) {
    %c0_i32 = arith.constant 0 : i32
    %c0_i32_0 = arith.constant 0 : i32
    %c0_i32_1 = arith.constant 0 : i32
    return %c0_i32, %c0_i32_0 : i32, i32
  }
  func.func @transform_2(%arg0: i32, %arg1: i32, %arg2: i32) -> (i32, i32, i32, i32) {
    %c0_i32 = arith.constant 0 : i32
    %c0_i32_0 = arith.constant 0 : i32
    return %arg0, %c0_i32, %arg1, %arg2 : i32, i32, i32, i32
  }
}

</mosaic_0001>

<llo_original>
// kernel: dwt.1
$region0: #{dwt.1}
  #allocation0 [shape = 'u32[]', space=smem, size = 0x4, offset = 0x4, fixed_abs, tag = 'smem constant byte address 0x4 - core index']
  #allocation1 [shape = 'u32[72,128]{1,0:T(1,128)}', space=vmem, size = 0x9000, scoped, tag = 'internal scratch']
  %s0 = inlined_call_operand.hbm [shape: f32[24,16,16], index: 0, kind: input, shape index: {}]
  %s1 = inlined_call_operand.vmem [shape: f32[16,16], index: 1, kind: input, shape index: {}]
  %s2 = inlined_call_operand.hbm [shape: f32[24,4,8,8], index: 2, kind: output, shape index: {}]
  %s3 = sld [smem:[#allocation0]]
  $region45: #{dwt.1} parent=0
    _
  %s5 = ssub.s32 1, %s3
  %s6 = scalar_select 0, %s5, %s3
  $region1: #{dwt.1} parent=0
    #allocation2 [shape = 'u8[49152]{0}', space=vmem, size = 0xc000, scoped, tag = 'input window, operand 0']
    #allocation3 [shape = 's32[2]{0}', space=sflag, size = 0x8, scoped, tag = 'scoped memory for dwt.1']
    #allocation4 [shape = 's32[2]{0}', space=sflag, size = 0x8, scoped, tag = 'scoped memory for dwt.1']
    #allocation5 [shape = 'u8[98304]{0}', space=vmem, size = 0x18000, scoped, tag = 'output window, operand 0']
    %7 = vsyncpa [#allocation3], 0
    %s8 = scalar_lea.sflag [#allocation3], 1
    %9 = vsyncpa %s8, 0
    %10 = vsyncpa [#allocation4], 0
    %s11 = scalar_lea.sflag [#allocation4], 1
    %12 = vsyncpa %s11, 0
    loop: start=0, step=1, limit=10
    $region2: #{dwt.1} parent=1 // loop_pre_header
      _
    $region3: #{dwt.1} parent=1 // loop_header
      %s14 = sphi 0, %s18
      %p15 = scmp.ge.s32.totalorder %s14, 10
      %s21 = sphi 0, %s40
      %s22 = sphi 0, %s36
      %s23 = sphi 0, %s32
      %s24 = sphi 0, %s21
      %s25 = sphi 0, %s22
      %s26 = sphi 0, %s23
      %s27 = sphi 0, %s24
      %s28 = sphi 0, %s25
      %s29 = sphi 0, %s26
      %s47 = sphi 0, %s49
      %s50 = sphi 0, %s47
      %s51 = sphi 0, %s50
      %s67 = sphi 0, %s51
      %s71 = sphi 0, %s71
      %s73 = sphi 0, %s71
      %s74 = sphi 0, %s73
      %s88 = sphi 0, %s74
      %s98 = sphi 0, %s100
      %s101 = sphi 0, %s98
      %s102 = sphi 0, %s101
      %s118 = sphi 0, %s102
    $region4: #{dwt.1} parent=1 // loop_header_branch
      %17 = sbr.rel (%p15) target = $region8
    $region5: #{dwt.1} parent=1 // loop_body
      %s19 = ssub.s32 %s14, 1
      %s20 = ssub.s32 %s14, 2
      %s30 = sadd.s32 1, %s23
      %p31 = scmp.ge.s32.totalorder %s30, 1
      %s32 = scalar_select %p31, 0, %s30
      %s33 = sadd.s32 1, %s22
      %s34 = scalar_select %p31, %s33, %s22
      %p35 = scmp.ge.s32.totalorder %s34, 1
      %s36 = scalar_select %p35, 0, %s34
      %s37 = sadd.s32 1, %s21
      %s38 = scalar_select %p35, %s37, %s21
      %p39 = scmp.ge.s32.totalorder %s38, 8
      %s40 = scalar_select %p39, 0, %s38
      %s41 = ssub.s32 %s21, %s40
      %s42 = ssub.s32 %s22, %s36
      %s43 = sor.u32 %s41, %s42
      %s44 = ssub.s32 %s23, %s32
      %s45 = sor.u32 %s43, %s44
      %p46 = scmp.eq.s32.totalorder %s45, 0
      %s48 = sadd.s32 %s47, 1
      %s49 = scalar_select %p46, %s47, %s48
      %p52 = pneg %p46
      %p53 = scmp.eq.s32.totalorder %s14, 7
      %p54 = por %p52, %p53
      %p55 = scmp.ne.s32.totalorder %s47, %s50
      %p56 = scmp.eq.s32.totalorder %s14, 0
      %p57 = por %p55, %p56
      %p58 = scmp.ne.s32.totalorder %s47, %s50
      %p59 = scmp.eq.s32.totalorder %s19, 7
      %p60 = por %p58, %p59
      %p61 = scmp.ne.s32.totalorder %s50, %s51
      %p62 = scmp.eq.s32.totalorder %s19, 0
      %p63 = por %p61, %p62
      %p64 = scmp.ne.s32.totalorder %s50, %s51
      %p65 = scmp.eq.s32.totalorder %s20, 7
      %p66 = por %p64, %p65
      %p68 = scmp.ne.s32.totalorder %s51, %s67
      %p69 = scmp.eq.s32.totalorder %s20, 0
      %p70 = por %p68, %p69
      %s72 = sadd.s32 %s71, 1
      %p75 = scmp.eq.s32.totalorder %s14, 7
      %p76 = scmp.ne.s32.totalorder %s71, %s73
      %p77 = scmp.eq.s32.totalorder %s14, 0
      %p78 = por %p76, %p77
      %p79 = scmp.ne.s32.totalorder %s71, %s73
      %p80 = scmp.eq.s32.totalorder %s19, 7
      %p81 = por %p79, %p80
      %p82 = scmp.ne.s32.totalorder %s73, %s74
      %p83 = scmp.eq.s32.totalorder %s19, 0
      %p84 = por %p82, %p83
      %p85 = scmp.ne.s32.totalorder %s73, %s74
      %p86 = scmp.eq.s32.totalorder %s20, 7
      %p87 = por %p85, %p86
      %p89 = scmp.ne.s32.totalorder %s74, %s88
      %p90 = scmp.eq.s32.totalorder %s20, 0
      %p91 = por %p89, %p90
      %s92 = ssub.s32 %s21, %s40
      %s93 = ssub.s32 %s22, %s36
      %s94 = sor.u32 %s92, %s93
      %s95 = ssub.s32 %s23, %s32
      %s96 = sor.u32 %s94, %s95
      %p97 = scmp.eq.s32.totalorder %s96, 0
      %s99 = sadd.s32 %s98, 1
      %s100 = scalar_select %p97, %s98, %s99
      %p103 = pneg %p97
      %p104 = scmp.eq.s32.totalorder %s14, 7
      %p105 = por %p103, %p104
      %p106 = scmp.ne.s32.totalorder %s98, %s101
      %p107 = scmp.eq.s32.totalorder %s14, 0
      %p108 = por %p106, %p107
      %p109 = scmp.ne.s32.totalorder %s98, %s101
      %p110 = scmp.eq.s32.totalorder %s19, 7
      %p111 = por %p109, %p110
      %p112 = scmp.ne.s32.totalorder %s101, %s102
      %p113 = scmp.eq.s32.totalorder %s19, 0
      %p114 = por %p112, %p113
      %p115 = scmp.ne.s32.totalorder %s101, %s102
      %p116 = scmp.eq.s32.totalorder %s20, 7
      %p117 = por %p115, %p116
      %p119 = scmp.ne.s32.totalorder %s102, %s118
      %p120 = scmp.eq.s32.totalorder %s20, 0
      %p121 = por %p119, %p120
      %p122 = scmp.le.s32.totalorder 1, %s14
      %p123 = scmp.lt.s32.totalorder %s14, 9
      %p124 = pnand %p122, %p123
      %p125 = pneg %p124
      // Predicated region
      $region9: #{dwt.1} parent=5 // pred_check
        _
      $region10: #{dwt.1} parent=5 // pred_check_branch
        %127 = sbr.rel (%p124) target = $region12
      $region11: #{dwt.1} parent=5 // pred_region
        %s128 = ssub.s32 %s14, 1
        // Predicated region
        $region13: #{dwt.1} parent=11 // pred_check
          %p129 = pneg %p84
        $region14: #{dwt.1} parent=11 // pred_check_branch
          %131 = sbr.rel (%p129) target = $region16
        $region15: #{dwt.1} parent=11 // pred_region
          _
        $region16: #{dwt.1} parent=11 // pred_fallthru
          _
      $region12: #{dwt.1} parent=5 // pred_fallthru
        _
      %p132 = scmp.lt.s32.totalorder %s14, 8
      // Predicated region
      $region17: #{dwt.1} parent=5 // pred_check
        %p133 = pneg %p132
      $region18: #{dwt.1} parent=5 // pred_check_branch
        %135 = sbr.rel (%p133) target = $region20
      $region19: #{dwt.1} parent=5 // pred_region
        // Predicated region
        $region21: #{dwt.1} parent=19 // pred_check
          %p136 = pneg %p57
        $region22: #{dwt.1} parent=19 // pred_check_branch
          %138 = sbr.rel (%p136) target = $region24
        $region23: #{dwt.1} parent=19 // pred_region
          %s139 = sand.u32 %s47, 1
          %s140 = scalar_lea.sflag [#allocation3], %s139
          %s141 = sand.u32 %s47, 1
          %s142 = smul.addr %s141, 48
          %s143 = scalar_lea.vmem [#allocation2], %s142
          %s144 = smul.u32 3, %s21
          %s145 = smul.u32 2, %s22
          %147 = vsyncadd %s140, 0
          %s148 = sadd.s32 %s23, %s145
          %s149 = smul.addr %s144, 2
          %s150 = sadd.s32 %s148, %s149
          %s151 = smul.addr %s150, 8
          %s152 = scalar_lea.hbm %s0, %s151
          %s153 = sshll.u32 %s152, 4
          %s154 = int_to_ptr.hbm [resolvable:$true] %s153
          %s155 = sshll.u32 %s143, 4
          %s156 = int_to_ptr.vmem [resolvable:$true] %s155
          %161 = dma.hbm_to_vmem [thread:$0]  %s154, 768, %s156, %s140, 128, 128, 8
        $region24: #{dwt.1} parent=19 // pred_fallthru
          _
      $region20: #{dwt.1} parent=5 // pred_fallthru
        _
      %p162 = scmp.le.s32.totalorder 1, %s14
      %p163 = scmp.lt.s32.totalorder %s14, 9
      %p164 = pnand %p162, %p163
      %p165 = pneg %p164
      // Predicated region
      $region25: #{dwt.1} parent=5 // pred_check
        _
      $region26: #{dwt.1} parent=5 // pred_check_branch
        %167 = sbr.rel (%p164) target = $region28
      $region27: #{dwt.1} parent=5 // pred_region
        %s168 = ssub.s32 %s14, 1
        %s169 = sand.u32 %s50, 1
        %s170 = scalar_lea.sflag [#allocation3], %s169
        %s171 = sand.u32 %s50, 1
        %s172 = smul.addr %s171, 48
        %s173 = scalar_lea.vmem [#allocation2], %s172
        // Predicated region
        $region29: #{dwt.1} parent=27 // pred_check
          %p174 = pneg %p63
        $region30: #{dwt.1} parent=27 // pred_check_branch
          %176 = sbr.rel (%p174) target = $region32
        $region31: #{dwt.1} parent=27 // pred_region
          %178 = dma.done %s170, 768
        $region32: #{dwt.1} parent=27 // pred_fallthru
          _
        %s179 = sand.u32 %s50, 1
        %s180 = scalar_lea.sflag [#allocation3], %s179
        %s181 = sand.u32 %s50, 1
        %s182 = smul.addr %s181, 48
        %s183 = scalar_lea.vmem [#allocation2], %s182
        %p184 = pneg %p63
        %p185 = pneg %p60
        %p186 = pneg %p84
        %p187 = pneg %p81
        %p188 = pneg %p114
        %p189 = pneg %p111
        %s190 = sand.u32 %s101, 1
        %s191 = scalar_lea.sflag [#allocation4], %s190
        %s192 = sand.u32 %s101, 1
        %s193 = smul.addr %s192, 96
        %s194 = scalar_lea.vmem [#allocation5], %s193
        %s195 = smul.u32 3, %s24
        %s196 = smul.u32 2, %s25
        %s197 = smul.u32 3, %s24
        %v198 = vld [vmem:[%s173] ss:$2 sm:$0xff]
        %s199 = scalar_lea.vmem %s173, 16 [#allocation2]
        %v200 = vld [vmem:[%s199] ss:$2 sm:$0xff]
        %s201 = scalar_lea.vmem %s173, 32 [#allocation2]
        %v202 = vld [vmem:[%s201] ss:$2 sm:$0xff]
        %s203 = scalar_lea.vmem %s173, 1 [#allocation2]
        %v204 = vld [vmem:[%s203] ss:$2 sm:$0xff]
        %s205 = scalar_lea.vmem %s173, 17 [#allocation2]
        %v206 = vld [vmem:[%s205] ss:$2 sm:$0xff]
        %s207 = scalar_lea.vmem %s173, 33 [#allocation2]
        %v208 = vld [vmem:[%s207] ss:$2 sm:$0xff]
        %v209 = vadd.f32 %v198, %v204
        %v210 = vadd.f32 %v200, %v206
        %v211 = vadd.f32 %v202, %v208
        %v212 = vsub.f32 %v204, %v198
        %v213 = vsub.f32 %v206, %v200
        %v214 = vsub.f32 %v208, %v202
        %v215 = vld [vmem:[%s1] sm:$0xff]
        %v216 = vld [vmem:[%s1 + $0x8] sm:$0xff]
        %vm217 = vcmask 130048
        %v219 = vsel %vm217, %v209, 0
        %v222 = vsel %vm217, %v210, 0
        %v225 = vsel %vm217, %v211, 0
        %227 = vmatpush.msra.mxu0 0.0
        %228 = vmatpush.msra.mxu0 0.0
        %229 = vmatpush.msra.mxu0 0.0
        %230 = vmatpush.msra.mxu0 0.0
        %231 = vmatpush.msra.mxu0 0.0
        %232 = vmatpush.msra.mxu0 0.0
        %233 = vmatpush.msra.mxu0 0.0
        %234 = vmatpush.msra.mxu0 0.0
        %235 = vmatpush.msra.mxu0 0.0
        %236 = vmatpush.msra.mxu0 0.0
        %237 = vmatpush.msra.mxu0 0.0
        %238 = vmatpush.msra.mxu0 0.0
        %239 = vmatpush.msra.mxu0 0.0
        %240 = vmatpush.msra.mxu0 0.0
        %241 = vmatpush.msra.mxu0 %v216
        %242 = vmatpush.msra.mxu0 %v215
        %243 = vmatmul.f32.gmra.mxu0 %v219
        %v244 = vpop.f32.mrf.mxu0
        %v245 = vadd.f32 0.0, %v244
        %246 = vmatmul.f32.gmra.mxu0 %v222
        %v247 = vpop.f32.mrf.mxu0
        %v248 = vadd.f32 0.0, %v247
        %249 = vmatmul.f32.gmra.mxu0 %v225
        %v250 = vpop.f32.mrf.mxu0
        %v251 = vadd.f32 0.0, %v250
        %252 = vdwg.mxu0
        %v254 = vsel %vm217, %v212, 0
        %v257 = vsel %vm217, %v213, 0
        %v260 = vsel %vm217, %v214, 0
        %262 = vmatpush.msra.mxu0 0.0
        %263 = vmatpush.msra.mxu0 0.0
        %264 = vmatpush.msra.mxu0 0.0
        %265 = vmatpush.msra.mxu0 0.0
        %266 = vmatpush.msra.mxu0 0.0
        %267 = vmatpush.msra.mxu0 0.0
        %268 = vmatpush.msra.mxu0 0.0
        %269 = vmatpush.msra.mxu0 0.0
        %270 = vmatpush.msra.mxu0 0.0
        %271 = vmatpush.msra.mxu0 0.0
        %272 = vmatpush.msra.mxu0 0.0
        %273 = vmatpush.msra.mxu0 0.0
        %274 = vmatpush.msra.mxu0 0.0
        %275 = vmatpush.msra.mxu0 0.0
        %276 = vmatpush.msra.mxu0 %v216
        %277 = vmatpush.msra.mxu0 %v215
        %278 = vmatmul.f32.gmra.mxu0 %v254
        %v279 = vpop.f32.mrf.mxu0
        %v280 = vadd.f32 0.0, %v279
        %281 = vmatmul.f32.gmra.mxu0 %v257
        %v282 = vpop.f32.mrf.mxu0
        %v283 = vadd.f32 0.0, %v282
        %284 = vmatmul.f32.gmra.mxu0 %v260
        %v285 = vpop.f32.mrf.mxu0
        %v286 = vadd.f32 0.0, %v285
        %287 = vdwg.mxu0
        %vm288 = vcmask 64512
        %289 = vst.msk [vmem:[%s194] sm:$0xff] %vm288, %v245
        %290 = vst.msk [vmem:[%s194 + $0x20] sm:$0xff] %vm288, %v248
        %291 = vst.msk [vmem:[%s194 + $0x40] sm:$0xff] %vm288, %v251
        %295 = vrot.lane.b32.xlu0 %v245, 120
        %v296 = vpop.permute.xlu0 %295
        %297 = vrot.lane.b32.xlu0 %v248, 120
        %v298 = vpop.permute.xlu0 %297
        %299 = vrot.lane.b32.xlu0 %v251, 120
        %v300 = vpop.permute.xlu0 %299
        %s304 = scalar_lea.vmem %s194, 8 [#allocation5]
        %305 = vst.msk [vmem:[%s304] sm:$0xff] %vm288, %v296
        %306 = vst.msk [vmem:[%s304 + $0x20] sm:$0xff] %vm288, %v298
        %307 = vst.msk [vmem:[%s304 + $0x40] sm:$0xff] %vm288, %v300
        %s308 = scalar_lea.vmem %s194, 16 [#allocation5]
        %309 = vst.msk [vmem:[%s308] sm:$0xff] %vm288, %v280
        %310 = vst.msk [vmem:[%s308 + $0x20] sm:$0xff] %vm288, %v283
        %311 = vst.msk [vmem:[%s308 + $0x40] sm:$0xff] %vm288, %v286
        %315 = vrot.lane.b32.xlu0 %v280, 120
        %v316 = vpop.permute.xlu0 %315
        %317 = vrot.lane.b32.xlu0 %v283, 120
        %v318 = vpop.permute.xlu0 %317
        %319 = vrot.lane.b32.xlu0 %v286, 120
        %v320 = vpop.permute.xlu0 %319
        %s324 = scalar_lea.vmem %s194, 24 [#allocation5]
        %325 = vst.msk [vmem:[%s324] sm:$0xff] %vm288, %v316
        %326 = vst.msk [vmem:[%s324 + $0x20] sm:$0xff] %vm288, %v318
        %327 = vst.msk [vmem:[%s324 + $0x40] sm:$0xff] %vm288, %v320
        %s328 = sand.u32 %s101, 1
        %s329 = scalar_lea.sflag [#allocation4], %s328
        %s330 = sand.u32 %s101, 1
        %s331 = smul.addr %s330, 96
        %s332 = scalar_lea.vmem [#allocation5], %s331
        // Predicated region
        $region33: #{dwt.1} parent=27 // pred_check
          %p333 = pneg %p111
        $region34: #{dwt.1} parent=27 // pred_check_branch
          %335 = sbr.rel (%p333) target = $region36
        $region35: #{dwt.1} parent=27 // pred_region
          %s336 = smul.u32 3, %s24
          %338 = vsyncadd %s329, 0
          %s339 = sadd.s32 %s26, %s25
          %s340 = smul.addr %s336, 4
          %s341 = sadd.s32 %s339, %s340
          %s342 = smul.addr %s341, 8
          %s343 = scalar_lea.hbm %s2, %s342
          %s344 = sshll.u32 %s332, 4
          %s345 = int_to_ptr.vmem [resolvable:$true] %s344
          %s346 = sshll.u32 %s343, 4
          %s347 = int_to_ptr.hbm [resolvable:$true] %s346
          %352 = dma.vmem_to_hbm [thread:$0]  %s345, 1536, %s347, %s329, 128, 128, 8
        $region36: #{dwt.1} parent=27 // pred_fallthru
          _
      $region28: #{dwt.1} parent=5 // pred_fallthru
        _
      %p353 = scmp.le.s32.totalorder 2, %s14
      // Predicated region
      $region37: #{dwt.1} parent=5 // pred_check
        %p354 = pneg %p353
      $region38: #{dwt.1} parent=5 // pred_check_branch
        %356 = sbr.rel (%p354) target = $region40
      $region39: #{dwt.1} parent=5 // pred_region
        %s357 = ssub.s32 %s14, 2
        // Predicated region
        $region41: #{dwt.1} parent=39 // pred_check
          %p358 = pneg %p117
        $region42: #{dwt.1} parent=39 // pred_check_branch
          %360 = sbr.rel (%p358) target = $region44
        $region43: #{dwt.1} parent=39 // pred_region
          %s361 = sand.u32 %s102, 1
          %s362 = scalar_lea.sflag [#allocation4], %s361
          %s363 = sand.u32 %s102, 1
          %s364 = smul.addr %s363, 96
          %s365 = scalar_lea.vmem [#allocation5], %s364
          %367 = dma.done %s362, 1536
        $region44: #{dwt.1} parent=39 // pred_fallthru
          _
      $region40: #{dwt.1} parent=5 // pred_fallthru
        _
    $region6: #{dwt.1} parent=1 // loop_footer
      %s18 = sadd.s32 1, %s14
    $region7: #{dwt.1} parent=1 // loop_footer_branch
      %13 = sbr.rel target = $region3
    $region8: #{dwt.1} parent=1 // loop_exit
      _
    %368 = vsyncpa [#allocation3], 1
    %s369 = scalar_lea.sflag [#allocation3], 1
    %370 = vsyncpa %s369, 1
    %371 = vsyncpa [#allocation4], 1
    %s372 = scalar_lea.sflag [#allocation4], 1
    %373 = vsyncpa %s372, 1

</llo_original>
